<compile_context>
chip_gen: v7x
topology: tpu7x:2x2x1
jax: 0.10.0
libtpu: 0.0.40
codegen_flags: <defaults>
</compile_context>

<pallas_src>
import math

import jax
import jax.numpy as jnp
from jax.experimental import pallas as pl
from jax.experimental.pallas import tpu as pltpu


def _gelu_tanh(x):
    # 0.5 * x * (1 + tanh(sqrt(2/pi) * (x + 0.044715 * x^3)))  -- matches the
    # PyTorch GELU module in the spec. tanh lowers to the EUP.
    c = math.sqrt(2.0 / math.pi)
    return 0.5 * x * (1.0 + jnp.tanh(c * (x + 0.044715 * x * x * x)))


def _round_up(n, m):
    return ((n + m - 1) // m) * m


def _pad_2d(a, rows, cols):
    """Zero-pad a 2-D array up to (rows, cols); no-op if already that shape."""
    if a.shape == (rows, cols):
        return a
    return jnp.zeros((rows, cols), a.dtype).at[: a.shape[0], : a.shape[1]].set(a)


def _vmem_capacity_bytes():
    try:
        info = pltpu.get_tpu_info()
        cap = int(getattr(info, "vmem_capacity_bytes", 0))
        if cap > 0:
            return cap
    except Exception:
        pass
    return 64 << 20  # conservative default (v7x per-TensorCore VMEM)


# ----------------------------------------------------------------------------
# Kernels
# ----------------------------------------------------------------------------
def _mlp_resident_kernel(x_ref, w1_ref, b1_ref, w2_ref, b2_ref, o_ref):
    # Weights are fully VMEM-resident (constant block index -> single DMA).
    h = jnp.dot(x_ref[...], w1_ref[...], preferred_element_type=jnp.float32)
    h = _gelu_tanh(h + b1_ref[...].astype(jnp.float32))
    # Dropout (eval mode) = identity.
    y = jnp.dot(h.astype(w2_ref.dtype), w2_ref[...],
                preferred_element_type=jnp.float32)
    # Dropout (eval mode) = identity.
    o_ref[...] = (y + b2_ref[...].astype(jnp.float32)).astype(o_ref.dtype)


def _mlp_tiled_kernel(x_ref, w1_ref, b1_ref, w2_ref, b2_ref, o_ref, acc_ref):
    # x_ref : (tm, dim_p)      input row tile            (native/compute dtype)
    # w1_ref: (dim_p, th)      W1 hidden-chunk
    # b1_ref: (1, th)          bias-1 hidden-chunk
    # w2_ref: (th, dim_p)      W2 hidden-chunk
    # b2_ref: (1, dim_p)       bias-2
    # o_ref : (tm, dim_p)      output row tile
    # acc_ref: (tm, dim_p) f32 accumulator over the hidden axis
    j = pl.program_id(1)

    h = jnp.dot(x_ref[...], w1_ref[...], preferred_element_type=jnp.float32)
    h = _gelu_tanh(h + b1_ref[...].astype(jnp.float32))
    # Dropout (eval mode) = identity.
    contrib = jnp.dot(h.astype(w2_ref.dtype), w2_ref[...],
                      preferred_element_type=jnp.float32)

    @pl.when(j == 0)
    def _():
        acc_ref[...] = contrib          # direct store: no zero-init + add

    @pl.when(j > 0)
    def _():
        acc_ref[...] += contrib

    @pl.when(j == pl.num_programs(1) - 1)
    def _():
        # Dropout (eval mode) = identity.
        o_ref[...] = (acc_ref[...] + b2_ref[...].astype(jnp.float32)
                      ).astype(o_ref.dtype)


# ----------------------------------------------------------------------------
# Tiling selection (dtype- and generation-aware VMEM budget)
# ----------------------------------------------------------------------------
def _select_tiling(M, dim, hidden, x_isz, w_isz, o_isz, b_isz, tm_req, budget):
    dim_p = _round_up(dim, 128)
    hid128 = _round_up(hidden, 128)
    m8 = _round_up(max(M, 1), 8)

    tms = sorted({min(_round_up(t, 8), m8)
                  for t in (tm_req, 1024, 512, 256, 128, 64, 32, 16, 8)},
                 reverse=True)

    def resident_bytes(tm_):
        return (2 * 2 * dim_p * hid128 * w_isz        # W1+W2 blocks (x2 buffers)
                + 2 * 8 * (hid128 + dim_p) * b_isz    # biases (sublane-padded)
                + 2 * tm_ * dim_p * x_isz             # x tile (double-buffered)
                + 2 * tm_ * dim_p * o_isz             # out tile (double-buffered)
                + tm_ * hid128 * 4                    # h (f32 intermediate)
                + tm_ * dim_p * 4)                    # y (f32 intermediate)

    tm_floor = min(128, m8)
    for tm_ in tms:
        if tm_ < tm_floor:
            break
        if resident_bytes(tm_) <= budget:
            return "resident", tm_, hid128, hid128, resident_bytes(tm_)

    def tiled_bytes(tm_, th_):
        return (2 * 2 * dim_p * th_ * w_isz           # W1+W2 chunks (x2 buffers)
                + 2 * 8 * (th_ + dim_p) * b_isz
                + 2 * tm_ * dim_p * x_isz
                + 2 * tm_ * dim_p * o_isz
                + tm_ * dim_p * 4                     # f32 accumulator scratch
                + tm_ * th_ * 4                       # h (f32 intermediate)
                + tm_ * dim_p * 4)                    # per-chunk contribution

    th_cap = _round_up(hidden, 256)                   # prefer 256-multiples
    for tm_ in tms:
        th_ = th_cap
        while th_ >= 256:
            if tiled_bytes(tm_, th_) <= budget:
                return "tiled", tm_, th_, _round_up(hidden, th_), tiled_bytes(tm_, th_)
            th_ -= 256
        if tiled_bytes(tm_, 128) <= budget:
            return "tiled", tm_, 128, _round_up(hidden, 128), tiled_bytes(tm_, 128)

    # Nothing fits the budget; fall back to smallest tiles and let the compiler cope.
    tm_min = min(8, m8)
    return "tiled", tm_min, 128, _round_up(hidden, 128), tiled_bytes(tm_min, 128)


# ----------------------------------------------------------------------------
# Public wrapper
# ----------------------------------------------------------------------------
def mlp_block(x, w1, b1, w2, b2, *, tm=None, compute_dtype=None,
              vmem_fraction=0.6):
    """x: (..., dim) -> (..., dim). Fused MLP forward on TPU (eval-mode dropout)."""
    orig_shape = x.shape
    dim = orig_shape[-1]
    hidden = w1.shape[1]
    out_dtype = x.dtype

    x2d = x.reshape(-1, dim)
    M = x2d.shape[0]

    # Optional cast of MXU operands (e.g. bf16 on v5e/v6e). f32 accumulation is
    # kept via preferred_element_type; default keeps the model's native dtype.
    if compute_dtype is not None:
        x2d = x2d.astype(compute_dtype)
        w1 = w1.astype(compute_dtype)
        w2 = w2.astype(compute_dtype)

    x_isz = jnp.dtype(x2d.dtype).itemsize
    w_isz = jnp.dtype(w1.dtype).itemsize
    o_isz = jnp.dtype(out_dtype).itemsize
    b_isz = jnp.dtype(b1.dtype).itemsize

    vmem_cap = _vmem_capacity_bytes()
    budget = int(vmem_cap * vmem_fraction)
    tm_req = 512 if tm is None else tm

    mode, tm_eff, th, hidden_p, fp_bytes = _select_tiling(
        M, dim, hidden, x_isz, w_isz, o_isz, b_isz, tm_req, budget)

    # v7x has 2 TensorCores sharing HBM: keep at least two row tiles on the
    # "parallel" axis when there is enough work to split.
    if M >= 256 and _round_up(M, tm_eff) // tm_eff < 2:
        tm_eff = _round_up((M + 1) // 2, 8)

    dim_p = _round_up(dim, 128)
    M_p = _round_up(M, tm_eff)
    n_row = M_p // tm_eff

    # Zero-pad only when needed. Zero padding provably contributes zero to the
    # valid output region (GELU(0)=0 and padded W2 rows/cols are zero); padded
    # output rows/cols are sliced away.
    xp = _pad_2d(x2d, M_p, dim_p)
    w1p = _pad_2d(w1, dim_p, hidden_p)
    b1p = _pad_2d(b1.reshape(1, -1), 1, hidden_p)
    w2p = _pad_2d(w2, hidden_p, dim_p)
    b2p = _pad_2d(b2.reshape(1, -1), 1, dim_p)

    weight_passes = 1 if mode == "resident" else n_row
    cost = pl.CostEstimate(
        flops=4 * M_p * dim_p * hidden_p,              # two matmuls
        transcendentals=M_p * hidden_p,                # tanh in GELU
        bytes_accessed=int(
            M_p * dim_p * (x_isz + o_isz)
            + weight_passes * (2 * dim_p * hidden_p * w_isz
                               + (hidden_p + dim_p) * b_isz)),
    )

    vmem_limit = min(int(vmem_cap * 0.98),
                     max(int(fp_bytes * 1.2) + (2 << 20), 32 << 20))

    if mode == "resident":
        grid_spec = pltpu.PrefetchScalarGridSpec(
            num_scalar_prefetch=0,
            grid=(n_row,),
            in_specs=[
                pl.BlockSpec((tm_eff, dim_p), lambda i: (i, 0)),      # x rows
                # Constant block indices: weights/biases are DMA'd into VMEM
                # once and reused across every row tile (no re-streaming).
                pl.BlockSpec((dim_p, hidden_p), lambda i: (0, 0)),    # W1
                pl.BlockSpec((1, hidden_p), lambda i: (0, 0)),        # b1
                pl.BlockSpec((hidden_p, dim_p), lambda i: (0, 0)),    # W2
                pl.BlockSpec((1, dim_p), lambda i: (0, 0)),           # b2
            ],
            out_specs=pl.BlockSpec((tm_eff, dim_p), lambda i: (i, 0)),
            scratch_shapes=[],
        )
        kernel = _mlp_resident_kernel
        dims = ("parallel",)
    else:
        n_hid = hidden_p // th
        grid_spec = pltpu.PrefetchScalarGridSpec(
            num_scalar_prefetch=0,
            grid=(n_row, n_hid),
            in_specs=[
                pl.BlockSpec((tm_eff, dim_p), lambda i, j: (i, 0)),   # x rows
                pl.BlockSpec((dim_p, th), lambda i, j: (0, j)),       # W1 chunk
                pl.BlockSpec((1, th), lambda i, j: (0, j)),           # b1 chunk
                pl.BlockSpec((th, dim_p), lambda i, j: (j, 0)),       # W2 chunk
                pl.BlockSpec((1, dim_p), lambda i, j: (0, 0)),        # b2
            ],
            out_specs=pl.BlockSpec((tm_eff, dim_p), lambda i, j: (i, 0)),
            scratch_shapes=[pltpu.VMEM((tm_eff, dim_p), jnp.float32)],
        )
        kernel = _mlp_tiled_kernel
        dims = ("parallel", "arbitrary")

    out = pl.pallas_call(
        kernel,
        out_shape=jax.ShapeDtypeStruct((M_p, dim_p), out_dtype),
        grid_spec=grid_spec,
        compiler_params=pltpu.CompilerParams(
            dimension_semantics=dims,
            vmem_limit_bytes=vmem_limit),
        cost_estimate=cost,
    )(xp, w1p, b1p, w2p, b2p)

    if (M_p, dim_p) != (M, dim):
        out = out[:M, :dim]
    return out.reshape(orig_shape)


def _reference(x, w1, b1, w2, b2):
    h = x @ w1 + b1
    h = _gelu_tanh(h)
    return h @ w2 + b2


if __name__ == "__main__":
    # Small shapes implied by the module: tokens (batch, seq, dim), hidden MLP dim.
    batch, seq, dim, hidden = 2, 8, 32, 64

    key = jax.random.PRNGKey(0)
    kx, k1, k2, k3, k4 = jax.random.split(key, 5)

    x = jax.random.normal(kx, (batch, seq, dim), dtype=jnp.float32)

    # Deterministic parameter init (PyTorch-like uniform fan-in scaling).
    bound1 = 1.0 / math.sqrt(dim)
    bound2 = 1.0 / math.sqrt(hidden)
    w1 = jax.random.uniform(k1, (dim, hidden), jnp.float32, -bound1, bound1)
    b1 = jax.random.uniform(k2, (hidden,), jnp.float32, -bound1, bound1)
    w2 = jax.random.uniform(k3, (hidden, dim), jnp.float32, -bound2, bound2)
    b2 = jax.random.uniform(k4, (dim,), jnp.float32, -bound2, bound2)

    out = mlp_block(x, w1, b1, w2, b2)
    out = jax.block_until_ready(out)

    ref = _reference(x.reshape(-1, dim), w1, b1, w2, b2).reshape(x.shape)
    assert out.shape == x.shape
    assert jnp.allclose(out, ref, atol=1e-5, rtol=1e-5), "mismatch vs reference"

    print("KERNEL_OK")
</pallas_src>

<mosaic_0001>
module attributes {stable_mosaic.version = 11 : i64} {
  func.func @_mlp_resident_kernel(%arg0: i32, %arg1: memref<16x128xf32, #tpu.memory_space<vmem>>, %arg2: memref<128x128xf32, #tpu.memory_space<vmem>>, %arg3: memref<1x128xf32, #tpu.memory_space<vmem>>, %arg4: memref<128x128xf32, #tpu.memory_space<vmem>>, %arg5: memref<1x128xf32, #tpu.memory_space<vmem>>, %arg6: memref<16x128xf32, #tpu.memory_space<vmem>>) attributes {dimension_semantics = [#tpu.dimension_semantics<parallel>], iteration_bounds = array<i64: 1>, scalar_prefetch = 0 : i64, scratch_operands = 0 : i64, tpu.core_type = #tpu.core_type<tc>, window_params = [{transform_indices = @transform_0, window_bounds = array<i64: 16, 128>}, {pipeline_mode = #tpu.pipeline_mode<synchronous>, transform_indices = @transform_1, window_bounds = array<i64: 128, 128>}, {pipeline_mode = #tpu.pipeline_mode<synchronous>, transform_indices = @transform_2, window_bounds = array<i64: 1, 128>}, {pipeline_mode = #tpu.pipeline_mode<synchronous>, transform_indices = @transform_3, window_bounds = array<i64: 128, 128>}, {pipeline_mode = #tpu.pipeline_mode<synchronous>, transform_indices = @transform_4, window_bounds = array<i64: 1, 128>}, {transform_indices = @transform_5, window_bounds = array<i64: 16, 128>}]} {
    %c0 = arith.constant 0 : index
    %c0_0 = arith.constant 0 : index
    %0 = vector.load %arg1[%c0, %c0_0] : memref<16x128xf32, #tpu.memory_space<vmem>>, vector<16x128xf32>
    %c0_1 = arith.constant 0 : index
    %c0_2 = arith.constant 0 : index
    %1 = vector.load %arg2[%c0_1, %c0_2] : memref<128x128xf32, #tpu.memory_space<vmem>>, vector<128x128xf32>
    %cst = arith.constant dense<0.000000e+00> : vector<16x128xf32>
    %2 = tpu.matmul %0, %1, %cst {dimension_numbers = #tpu.dot_dimension_numbers<[1], [0], [0], [1], [0, 0, 1, 1], [], []>} : vector<16x128xf32>, vector<128x128xf32>, vector<16x128xf32> -> vector<16x128xf32>
    %c0_3 = arith.constant 0 : index
    %c0_4 = arith.constant 0 : index
    %3 = vector.load %arg3[%c0_3, %c0_4] : memref<1x128xf32, #tpu.memory_space<vmem>>, vector<1x128xf32>
    %4 = vector.broadcast %3 : vector<1x128xf32> to vector<16x128xf32>
    %5 = arith.addf %2, %4 : vector<16x128xf32>
    %cst_5 = arith.constant 5.000000e-01 : f32
    %6 = vector.broadcast %cst_5 : f32 to vector<16x128xf32>
    %7 = arith.mulf %6, %5 : vector<16x128xf32>
    %cst_6 = arith.constant 4.471500e-02 : f32
    %8 = vector.broadcast %cst_6 : f32 to vector<16x128xf32>
    %9 = arith.mulf %8, %5 : vector<16x128xf32>
    %10 = arith.mulf %9, %5 : vector<16x128xf32>
    %11 = arith.mulf %10, %5 : vector<16x128xf32>
    %12 = arith.addf %5, %11 : vector<16x128xf32>
    %cst_7 = arith.constant 0.797884583 : f32
    %13 = vector.broadcast %cst_7 : f32 to vector<16x128xf32>
    %14 = arith.mulf %13, %12 : vector<16x128xf32>
    %15 = math.tanh %14 : vector<16x128xf32>
    %cst_8 = arith.constant 1.000000e+00 : f32
    %16 = vector.broadcast %cst_8 : f32 to vector<16x128xf32>
    %17 = arith.addf %16, %15 : vector<16x128xf32>
    %18 = arith.mulf %7, %17 : vector<16x128xf32>
    %c0_9 = arith.constant 0 : index
    %c0_10 = arith.constant 0 : index
    %19 = vector.load %arg4[%c0_9, %c0_10] : memref<128x128xf32, #tpu.memory_space<vmem>>, vector<128x128xf32>
    %cst_11 = arith.constant dense<0.000000e+00> : vector<16x128xf32>
    %20 = tpu.matmul %18, %19, %cst_11 {dimension_numbers = #tpu.dot_dimension_numbers<[1], [0], [0], [1], [0, 0, 1, 1], [], []>} : vector<16x128xf32>, vector<128x128xf32>, vector<16x128xf32> -> vector<16x128xf32>
    %c0_12 = arith.constant 0 : index
    %c0_13 = arith.constant 0 : index
    %21 = vector.load %arg5[%c0_12, %c0_13] : memref<1x128xf32, #tpu.memory_space<vmem>>, vector<1x128xf32>
    %22 = vector.broadcast %21 : vector<1x128xf32> to vector<16x128xf32>
    %23 = arith.addf %20, %22 : vector<16x128xf32>
    %c0_14 = arith.constant 0 : index
    %c0_15 = arith.constant 0 : index
    %24 = vector.load %arg6[%c0_14, %c0_15] : memref<16x128xf32, #tpu.memory_space<vmem>>, vector<16x128xf32>
    tpu.vector_store %arg6[%c0_14, %c0_15], %23 {strides = array<i32>} : memref<16x128xf32, #tpu.memory_space<vmem>>, vector<16x128xf32>,
    return
  }
  func.func @transform_0(%arg0: i32) -> (i32, i32) {
    %c0_i32 = arith.constant 0 : i32
    %c0_i32_0 = arith.constant 0 : i32
    return %arg0, %c0_i32 : i32, i32
  }
  func.func @transform_1(%arg0: i32) -> (i32, i32) {
    %c0_i32 = arith.constant 0 : i32
    %c0_i32_0 = arith.constant 0 : i32
    %c0_i32_1 = arith.constant 0 : i32
    return %c0_i32, %c0_i32_0 : i32, i32
  }
  func.func @transform_2(%arg0: i32) -> (i32, i32) {
    %c0_i32 = arith.constant 0 : i32
    %c0_i32_0 = arith.constant 0 : i32
    %c0_i32_1 = arith.constant 0 : i32
    return %c0_i32, %c0_i32_0 : i32, i32
  }
  func.func @transform_3(%arg0: i32) -> (i32, i32) {
    %c0_i32 = arith.constant 0 : i32
    %c0_i32_0 = arith.constant 0 : i32
    %c0_i32_1 = arith.constant 0 : i32
    return %c0_i32, %c0_i32_0 : i32, i32
  }
  func.func @transform_4(%arg0: i32) -> (i32, i32) {
    %c0_i32 = arith.constant 0 : i32
    %c0_i32_0 = arith.constant 0 : i32
    %c0_i32_1 = arith.constant 0 : i32
    return %c0_i32, %c0_i32_0 : i32, i32
  }
  func.func @transform_5(%arg0: i32) -> (i32, i32) {
    %c0_i32 = arith.constant 0 : i32
    %c0_i32_0 = arith.constant 0 : i32
    return %arg0, %c0_i32 : i32, i32
  }
}

</mosaic_0001>

<llo_original>
// kernel: tpu_custom_call.1
$region0: #{tpu_custom_call.1}
  #allocation0 [shape = 'u32[]', space=smem, size = 0x4, offset = 0x4, fixed_abs, tag = 'smem constant byte address 0x4 - core index']
  #allocation1 [shape = 'u32[144,128]{1,0:T(1,128)}', space=vmem, size = 0x12000, scoped, tag = 'internal scratch']
  %s0 = inlined_call_operand.hbm [shape: f32[16,128], index: 0, kind: input, shape index: {}]
  %s1 = inlined_call_operand.hbm [shape: f32[128,128], index: 1, kind: input, shape index: {}]
  %s2 = inlined_call_operand.vmem [shape: f32[1,128], index: 2, kind: input, shape index: {}]
  %s3 = inlined_call_operand.hbm [shape: f32[128,128], index: 3, kind: input, shape index: {}]
  %s4 = inlined_call_operand.vmem [shape: f32[1,128], index: 4, kind: input, shape index: {}]
  %s5 = inlined_call_operand.hbm [shape: f32[16,128], index: 5, kind: output, shape index: {}]
  %s6 = sld [smem:[#allocation0]]
  $region42: #{tpu_custom_call.1} parent=0
    _
  %s8 = ssub.s32 1, %s6
  %s9 = scalar_select 0, %s8, %s6
  $region1: #{tpu_custom_call.1} parent=0
    #allocation2 [shape = 'u8[8192]{0}', space=vmem, size = 0x2000, scoped, tag = 'input window, operand 0, single buffered']
    #allocation3 [shape = 's32[1]{0}', space=sflag, size = 0x4, scoped, tag = 'scoped memory for tpu_custom_call.1']
    #allocation4 [shape = 's32[1]{0}', space=sflag, size = 0x4, scoped, tag = 'scoped memory for tpu_custom_call.1']
    #allocation5 [shape = 'u8[65536]{0}', space=vmem, size = 0x10000, scoped, tag = 'input window, operand 1, single buffered']
    #allocation6 [shape = 's32[1]{0}', space=sflag, size = 0x4, scoped, tag = 'scoped memory for tpu_custom_call.1']
    #allocation7 [shape = 'u8[65536]{0}', space=vmem, size = 0x10000, scoped, tag = 'input window, operand 3, single buffered']
    #allocation8 [shape = 'u8[8192]{0}', space=vmem, size = 0x2000, scoped, tag = 'output window, operand 0, single buffered']
    %10 = vsyncpa [#allocation3], 0
    %11 = vsyncpa [#allocation6], 0
    %12 = vsyncpa [#allocation4], 0
    // Predicated region
    $region2: #{tpu_custom_call.1} parent=1 // pred_check
      _
    $region3: #{tpu_custom_call.1} parent=1 // pred_check_branch
      %14 = sbr.rel (0) target = $region5
    $region4: #{tpu_custom_call.1} parent=1 // pred_region
      %s16 = ssub.s32 256, 256
      %17 = vsyncadd [#allocation3], %s16
      %s18 = sshll.u32 [#allocation2], 4
      %s19 = int_to_ptr.vmem [resolvable:$true] %s18
      %24 = dma.hbm_to_vmem [thread:$0]  %s0, 256, %s19, [#allocation3], 128, 128, 8
    $region5: #{tpu_custom_call.1} parent=1 // pred_fallthru
      _
    // Predicated region
    $region6: #{tpu_custom_call.1} parent=1 // pred_check
      _
    $region7: #{tpu_custom_call.1} parent=1 // pred_check_branch
      %26 = sbr.rel (0) target = $region9
    $region8: #{tpu_custom_call.1} parent=1 // pred_region
      %s28 = ssub.s32 2048, 2048
      %29 = vsyncadd [#allocation6], %s28
      %s30 = sshll.u32 [#allocation5], 4
      %s31 = int_to_ptr.vmem [resolvable:$true] %s30
      %36 = dma.hbm_to_vmem [thread:$0]  %s1, 2048, %s31, [#allocation6], 128, 128, 8
    $region9: #{tpu_custom_call.1} parent=1 // pred_fallthru
      _
    // Predicated region
    $region10: #{tpu_custom_call.1} parent=1 // pred_check
      _
    $region11: #{tpu_custom_call.1} parent=1 // pred_check_branch
      %38 = sbr.rel (0) target = $region13
    $region12: #{tpu_custom_call.1} parent=1 // pred_region
      _
    $region13: #{tpu_custom_call.1} parent=1 // pred_fallthru
      _
    // Predicated region
    $region14: #{tpu_custom_call.1} parent=1 // pred_check
      _
    $region15: #{tpu_custom_call.1} parent=1 // pred_check_branch
      %40 = sbr.rel (0) target = $region17
    $region16: #{tpu_custom_call.1} parent=1 // pred_region
      %s42 = ssub.s32 2048, 2048
      %43 = vsyncadd [#allocation6], %s42
      %s44 = sshll.u32 [#allocation7], 4
      %s45 = int_to_ptr.vmem [resolvable:$true] %s44
      %50 = dma.hbm_to_vmem [thread:$0]  %s3, 2048, %s45, [#allocation6], 128, 128, 8
    $region17: #{tpu_custom_call.1} parent=1 // pred_fallthru
      _
    // Predicated region
    $region18: #{tpu_custom_call.1} parent=1 // pred_check
      _
    $region19: #{tpu_custom_call.1} parent=1 // pred_check_branch
      %52 = sbr.rel (0) target = $region21
    $region20: #{tpu_custom_call.1} parent=1 // pred_region
      _
    $region21: #{tpu_custom_call.1} parent=1 // pred_fallthru
      _
    // Predicated region
    $region22: #{tpu_custom_call.1} parent=1 // pred_check
      _
    $region23: #{tpu_custom_call.1} parent=1 // pred_check_branch
      %54 = sbr.rel (0) target = $region25
    $region24: #{tpu_custom_call.1} parent=1 // pred_region
      %55 = dma.done [#allocation3], 256
    $region25: #{tpu_custom_call.1} parent=1 // pred_fallthru
      _
    // Predicated region
    $region26: #{tpu_custom_call.1} parent=1 // pred_check
      _
    $region27: #{tpu_custom_call.1} parent=1 // pred_check_branch
      %57 = sbr.rel (0) target = $region29
    $region28: #{tpu_custom_call.1} parent=1 // pred_region
      %58 = dma.done [#allocation6], 2048
    $region29: #{tpu_custom_call.1} parent=1 // pred_fallthru
      _
    // Predicated region
    $region30: #{tpu_custom_call.1} parent=1 // pred_check
      _
    $region31: #{tpu_custom_call.1} parent=1 // pred_check_branch
      %60 = sbr.rel (0) target = $region33
    $region32: #{tpu_custom_call.1} parent=1 // pred_region
      %61 = dma.done [#allocation6], 2048
    $region33: #{tpu_custom_call.1} parent=1 // pred_fallthru
      _
    %v62 = vld [vmem:[#allocation2] sm:$0xff]
    %v63 = vld [vmem:[#allocation2 + $0x8] sm:$0xff]
    %v64 = vld [vmem:[#allocation5] sm:$0xff]
    %v65 = vld [vmem:[#allocation5 + $0x8] sm:$0xff]
    %v66 = vld [vmem:[#allocation5 + $0x10] sm:$0xff]
    %v67 = vld [vmem:[#allocation5 + $0x18] sm:$0xff]
    %v68 = vld [vmem:[#allocation5 + $0x20] sm:$0xff]
    %v69 = vld [vmem:[#allocation5 + $0x28] sm:$0xff]
    %v70 = vld [vmem:[#allocation5 + $0x30] sm:$0xff]
    %v71 = vld [vmem:[#allocation5 + $0x38] sm:$0xff]
    %v72 = vld [vmem:[#allocation5 + $0x40] sm:$0xff]
    %v73 = vld [vmem:[#allocation5 + $0x48] sm:$0xff]
    %v74 = vld [vmem:[#allocation5 + $0x50] sm:$0xff]
    %v75 = vld [vmem:[#allocation5 + $0x58] sm:$0xff]
    %v76 = vld [vmem:[#allocation5 + $0x60] sm:$0xff]
    %v77 = vld [vmem:[#allocation5 + $0x68] sm:$0xff]
    %v78 = vld [vmem:[#allocation5 + $0x70] sm:$0xff]
    %v79 = vld [vmem:[#allocation5 + $0x78] sm:$0xff]
    %v80 = vld [vmem:[%s2] sm:$0x1]
    %v82 = vlaneseq
    %v83 = vshrl.u32 %v82, 7
    %v84 = vsub.s32 0, %v83
    %v85 = vrot.slane %v80, %v84
    %87 = vmatprep.subr.mxu0 0.0
    %88 = vmatpush1.msra.mxu0 %v64
    %89 = vmatprep.subr.mxu0 0.0
    %90 = vmatpush1.msra.mxu0 %v65
    %91 = vmatprep.subr.mxu0 0.0
    %92 = vmatpush1.msra.mxu0 %v66
    %93 = vmatprep.subr.mxu0 0.0
    %94 = vmatpush1.msra.mxu0 %v67
    %95 = vmatprep.subr.mxu0 0.0
    %96 = vmatpush1.msra.mxu0 %v68
    %97 = vmatprep.subr.mxu0 0.0
    %98 = vmatpush1.msra.mxu0 %v69
    %99 = vmatprep.subr.mxu0 0.0
    %100 = vmatpush1.msra.mxu0 %v70
    %101 = vmatprep.subr.mxu0 0.0
    %102 = vmatpush1.msra.mxu0 %v71
    %103 = vmatprep.subr.mxu0 0.0
    %104 = vmatpush1.msra.mxu0 %v72
    %105 = vmatprep.subr.mxu0 0.0
    %106 = vmatpush1.msra.mxu0 %v73
    %107 = vmatprep.subr.mxu0 0.0
    %108 = vmatpush1.msra.mxu0 %v74
    %109 = vmatprep.subr.mxu0 0.0
    %110 = vmatpush1.msra.mxu0 %v75
    %111 = vmatprep.subr.mxu0 0.0
    %112 = vmatpush1.msra.mxu0 %v76
    %113 = vmatprep.subr.mxu0 0.0
    %114 = vmatpush1.msra.mxu0 %v77
    %115 = vmatprep.subr.mxu0 0.0
    %116 = vmatpush1.msra.mxu0 %v78
    %117 = vmatprep.subr.mxu0 0.0
    %118 = vmatpush1.msra.mxu0 %v79
    %119 = vmatprep.subr.mxu0 0.0
    %120 = vmatpush1.msra.mxu0 0.0
    %121 = vmatprep.subr.mxu0 0.0
    %122 = vmatpush1.msra.mxu0 0.0
    %123 = vmatprep.subr.mxu0 0.0
    %124 = vmatpush1.msra.mxu0 0.0
    %125 = vmatprep.subr.mxu0 0.0
    %126 = vmatpush1.msra.mxu0 0.0
    %127 = vmatprep.subr.mxu0 0.0
    %128 = vmatpush1.msra.mxu0 0.0
    %129 = vmatprep.subr.mxu0 0.0
    %130 = vmatpush1.msra.mxu0 0.0
    %131 = vmatprep.subr.mxu0 0.0
    %132 = vmatpush1.msra.mxu0 0.0
    %133 = vmatprep.subr.mxu0 0.0
    %134 = vmatpush1.msra.mxu0 0.0
    %135 = vmatprep.subr.mxu0 0.0
    %136 = vmatpush1.msra.mxu0 0.0
    %137 = vmatprep.subr.mxu0 0.0
    %138 = vmatpush1.msra.mxu0 0.0
    %139 = vmatprep.subr.mxu0 0.0
    %140 = vmatpush1.msra.mxu0 0.0
    %141 = vmatprep.subr.mxu0 0.0
    %142 = vmatpush1.msra.mxu0 0.0
    %143 = vmatprep.subr.mxu0 0.0
    %144 = vmatpush1.msra.mxu0 0.0
    %145 = vmatprep.subr.mxu0 0.0
    %146 = vmatpush1.msra.mxu0 0.0
    %147 = vmatprep.subr.mxu0 0.0
    %148 = vmatpush1.msra.mxu0 0.0
    %149 = vmatprep.subr.mxu0 0.0
    %150 = vmatpush1.msra.mxu0 0.0
    %151 = vmatprep.mubr.f32.mxu0 0.0
    %152 = vmatmul.mubr.f32.gmra.mrb[0].mxu0 %v62
    %v153 = vpop.f32.mrb[0].mxu0
    %v154 = vadd.f32 %v85, %v153
    %v155 = vpop.f32.mrb[0].mxu0
    %156 = vmatprep.mubr.f32.mxu0 0.0
    %157 = vmatmul.mubr.f32.gmra.mrb[0].mxu0 %v63
    %v158 = vpop.f32.mrb[0].mxu0
    %v159 = vadd.f32 %v85, %v158
    %v160 = vpop.f32.mrb[0].mxu0
    %161 = vdwg.mxu0
    %v162 = vmul.f32 %v154, 0.5
    %v163 = vmul.f32 %v159, 0.5
    %v164 = vmul.f32 %v154, 0.044715
    %v165 = vmul.f32 %v159, 0.044715
    %v166 = vmul.f32 %v164, %v154
    %v167 = vmul.f32 %v165, %v159
    %v168 = vmul.f32 %v166, %v154
    %v169 = vmul.f32 %v167, %v159
    %v170 = vadd.f32 %v154, %v168
    %v171 = vadd.f32 %v159, %v169
    %v172 = vmul.f32 %v170, 0.7978846
    %v173 = vmul.f32 %v171, 0.7978846
    %v174 = vtanh.pop %v172
    %v175 = vtanh.pop %v173
    %v176 = vadd.f32 %v174, 1.0
    %v177 = vadd.f32 %v175, 1.0
    %v178 = vmul.f32 %v162, %v176
    %v179 = vmul.f32 %v163, %v177
    %v180 = vld [vmem:[#allocation7] sm:$0xff]
    %v181 = vld [vmem:[#allocation7 + $0x8] sm:$0xff]
    %v182 = vld [vmem:[#allocation7 + $0x10] sm:$0xff]
    %v183 = vld [vmem:[#allocation7 + $0x18] sm:$0xff]
    %v184 = vld [vmem:[#allocation7 + $0x20] sm:$0xff]
    %v185 = vld [vmem:[#allocation7 + $0x28] sm:$0xff]
    %v186 = vld [vmem:[#allocation7 + $0x30] sm:$0xff]
    %v187 = vld [vmem:[#allocation7 + $0x38] sm:$0xff]
    %v188 = vld [vmem:[#allocation7 + $0x40] sm:$0xff]
    %v189 = vld [vmem:[#allocation7 + $0x48] sm:$0xff]
    %v190 = vld [vmem:[#allocation7 + $0x50] sm:$0xff]
    %v191 = vld [vmem:[#allocation7 + $0x58] sm:$0xff]
    %v192 = vld [vmem:[#allocation7 + $0x60] sm:$0xff]
    %v193 = vld [vmem:[#allocation7 + $0x68] sm:$0xff]
    %v194 = vld [vmem:[#allocation7 + $0x70] sm:$0xff]
    %v195 = vld [vmem:[#allocation7 + $0x78] sm:$0xff]
    %v196 = vld [vmem:[%s4] sm:$0x1]
    %v198 = vlaneseq
    %v199 = vshrl.u32 %v198, 7
    %v200 = vsub.s32 0, %v199
    %v201 = vrot.slane %v196, %v200
    %203 = vmatprep.subr.mxu0 0.0
    %204 = vmatpush1.msra.mxu0 %v180
    %205 = vmatprep.subr.mxu0 0.0
    %206 = vmatpush1.msra.mxu0 %v181
    %207 = vmatprep.subr.mxu0 0.0
    %208 = vmatpush1.msra.mxu0 %v182
    %209 = vmatprep.subr.mxu0 0.0
    %210 = vmatpush1.msra.mxu0 %v183
    %211 = vmatprep.subr.mxu0 0.0
    %212 = vmatpush1.msra.mxu0 %v184
    %213 = vmatprep.subr.mxu0 0.0
    %214 = vmatpush1.msra.mxu0 %v185
    %215 = vmatprep.subr.mxu0 0.0
    %216 = vmatpush1.msra.mxu0 %v186
    %217 = vmatprep.subr.mxu0 0.0
    %218 = vmatpush1.msra.mxu0 %v187
    %219 = vmatprep.subr.mxu0 0.0
    %220 = vmatpush1.msra.mxu0 %v188
    %221 = vmatprep.subr.mxu0 0.0
    %222 = vmatpush1.msra.mxu0 %v189
    %223 = vmatprep.subr.mxu0 0.0
    %224 = vmatpush1.msra.mxu0 %v190
    %225 = vmatprep.subr.mxu0 0.0
    %226 = vmatpush1.msra.mxu0 %v191
    %227 = vmatprep.subr.mxu0 0.0
    %228 = vmatpush1.msra.mxu0 %v192
    %229 = vmatprep.subr.mxu0 0.0
    %230 = vmatpush1.msra.mxu0 %v193
    %231 = vmatprep.subr.mxu0 0.0
    %232 = vmatpush1.msra.mxu0 %v194
    %233 = vmatprep.subr.mxu0 0.0
    %234 = vmatpush1.msra.mxu0 %v195
    %235 = vmatprep.subr.mxu0 0.0
    %236 = vmatpush1.msra.mxu0 0.0
    %237 = vmatprep.subr.mxu0 0.0
    %238 = vmatpush1.msra.mxu0 0.0
    %239 = vmatprep.subr.mxu0 0.0
    %240 = vmatpush1.msra.mxu0 0.0
    %241 = vmatprep.subr.mxu0 0.0
    %242 = vmatpush1.msra.mxu0 0.0
    %243 = vmatprep.subr.mxu0 0.0
    %244 = vmatpush1.msra.mxu0 0.0
    %245 = vmatprep.subr.mxu0 0.0
    %246 = vmatpush1.msra.mxu0 0.0
    %247 = vmatprep.subr.mxu0 0.0
    %248 = vmatpush1.msra.mxu0 0.0
    %249 = vmatprep.subr.mxu0 0.0
    %250 = vmatpush1.msra.mxu0 0.0
    %251 = vmatprep.subr.mxu0 0.0
    %252 = vmatpush1.msra.mxu0 0.0
    %253 = vmatprep.subr.mxu0 0.0
    %254 = vmatpush1.msra.mxu0 0.0
    %255 = vmatprep.subr.mxu0 0.0
    %256 = vmatpush1.msra.mxu0 0.0
    %257 = vmatprep.subr.mxu0 0.0
    %258 = vmatpush1.msra.mxu0 0.0
    %259 = vmatprep.subr.mxu0 0.0
    %260 = vmatpush1.msra.mxu0 0.0
    %261 = vmatprep.subr.mxu0 0.0
    %262 = vmatpush1.msra.mxu0 0.0
    %263 = vmatprep.subr.mxu0 0.0
    %264 = vmatpush1.msra.mxu0 0.0
    %265 = vmatprep.subr.mxu0 0.0
    %266 = vmatpush1.msra.mxu0 0.0
    %267 = vmatprep.mubr.f32.mxu0 0.0
    %268 = vmatmul.mubr.f32.gmra.mrb[0].mxu0 %v178
    %v269 = vpop.f32.mrb[0].mxu0
    %v270 = vadd.f32 %v201, %v269
    %v271 = vpop.f32.mrb[0].mxu0
    %272 = vmatprep.mubr.f32.mxu0 0.0
    %273 = vmatmul.mubr.f32.gmra.mrb[0].mxu0 %v179
    %v274 = vpop.f32.mrb[0].mxu0
    %v275 = vadd.f32 %v201, %v274
    %v276 = vpop.f32.mrb[0].mxu0
    %277 = vdwg.mxu0
    %278 = vst [vmem:[#allocation8] sm:$0xff] %v270
    %279 = vst [vmem:[#allocation8 + $0x8] sm:$0xff] %v275
    // Predicated region
    $region34: #{tpu_custom_call.1} parent=1 // pred_check
      _
    $region35: #{tpu_custom_call.1} parent=1 // pred_check_branch
      %281 = sbr.rel (0) target = $region37
    $region36: #{tpu_custom_call.1} parent=1 // pred_region
      %s283 = ssub.s32 256, 256
      %284 = vsyncadd [#allocation4], %s283
      %s285 = sshll.u32 [#allocation8], 4
      %s286 = int_to_ptr.vmem [resolvable:$true] %s285
      %291 = dma.vmem_to_hbm [thread:$0]  %s286, 256, %s5, [#allocation4], 128, 128, 8
    $region37: #{tpu_custom_call.1} parent=1 // pred_fallthru
      _
    // Predicated region
    $region38: #{tpu_custom_call.1} parent=1 // pred_check
      _
    $region39: #{tpu_custom_call.1} parent=1 // pred_check_branch
      %293 = sbr.rel (0) target = $region41
    $region40: #{tpu_custom_call.1} parent=1 // pred_region
      %294 = dma.done [#allocation4], 256
    $region41: #{tpu_custom_call.1} parent=1 // pred_fallthru
      _
    %295 = vsyncpa [#allocation3], 1
    %296 = vsyncpa [#allocation6], 1
    %297 = vsyncpa [#allocation4], 1

</llo_original>
